<compile_context>
chip_gen: v7x
topology: tpu7x:2x2x1
jax: 0.10.0
libtpu: 0.0.40
codegen_flags: <defaults>
</compile_context>

<pallas_src>
import math

import jax
import jax.numpy as jnp
from jax import lax
from jax.experimental import pallas as pl
from jax.experimental.pallas import tpu as pltpu


_VMEM_LIMIT_BYTES = 32 * 1024 * 1024   # explicit scoped-VMEM limit (safe on v5e/v6e/v7x)
_TILE_BUDGET_BYTES = 20 * 1024 * 1024  # target for the double-buffered per-step working set
_UNROLL_LIMIT = 64                     # fully unroll the per-d loop up to this TD


def _lcm(a, b):
    return a * b // math.gcd(a, b)


def _pick_tiles(n, d, m1, m2, itemsize):
    """Choose (TN, TD) so blocks are layout-legal and fit the VMEM budget."""
    tn = n if n <= 256 else 256  # 256 rows = multiple of 8 sublanes

    def step_bytes(td):
        # double-buffered x, weight, bias, out blocks for one grid step
        return 2 * itemsize * (tn * td * m1 + td * m1 * m2 + td * m2 + tn * td * m2)

    if step_bytes(d) <= _TILE_BUDGET_BYTES:
        return tn, d  # whole d axis in one grid step (the common case)

    # TD < d: keep every block layout-legal:
    #   bias block needs TD % 8 == 0; flattened x/out blocks need
    #   TD*m1 % 128 == 0 and TD*m2 % 128 == 0.
    gran = _lcm(8, _lcm(128 // math.gcd(m1, 128), 128 // math.gcd(m2, 128)))
    td = (_TILE_BUDGET_BYTES // step_bytes(1)) // gran * gran
    if td <= 0:
        td = gran
    if td >= d:
        td = d
    return tn, td


def _make_kernel(td, m1, m2, has_bias):
    """Kernel over one (TN, TD) tile: TD independent (TN,m1)@(m1,m2) matmuls."""

    def kernel(*refs):
        if has_bias:
            x_ref, w_ref, b_ref, o_ref = refs
        else:
            x_ref, w_ref, o_ref = refs
            b_ref = None
        out_dtype = o_ref.dtype

        def one(t, xs):
            # xs: (TN, m1) slab for local linear t -> (TN, m2), f32 accumulation
            acc = jnp.dot(xs, w_ref[t], preferred_element_type=jnp.float32)
            if has_bias:
                acc = acc + b_ref[pl.ds(t, 1), :].astype(jnp.float32)
            return acc.astype(out_dtype)

        if td <= _UNROLL_LIMIT:
            x = x_ref[...]  # (TN, TD*m1) lane-dense load
            cols = [one(t, x[:, t * m1:(t + 1) * m1]) for t in range(td)]
            o_ref[...] = jnp.concatenate(cols, axis=-1)  # single lane-dense store
        else:
            # Fallback for very large TD: keep code size bounded.
            def body(t, carry):
                off_x = pl.multiple_of(t * m1, m1)
                off_o = pl.multiple_of(t * m2, m2)
                o_ref[:, pl.ds(off_o, m2)] = one(t, x_ref[:, pl.ds(off_x, m1)])
                return carry

            lax.fori_loop(0, td, body, 0)

    return kernel


def locally_connected_forward(x, weight, bias=None):
    """x: [n, d, m1], weight: [d, m1, m2], bias: [d, m2] or None -> [n, d, m2]."""
    n, d, m1 = x.shape
    d_w, m1_w, m2 = weight.shape
    assert d == d_w and m1 == m1_w, (x.shape, weight.shape)
    if bias is not None:
        assert bias.shape == (d, m2), bias.shape

    out_dtype = jnp.result_type(x.dtype, weight.dtype)
    itemsize = max(jnp.dtype(x.dtype).itemsize, jnp.dtype(weight.dtype).itemsize)
    tn, td = _pick_tiles(n, d, m1, m2, itemsize)
    grid_d = pl.cdiv(d, td)
    grid_n = pl.cdiv(n, tn)

    # Free, contiguous views (no HBM transpose round trips).
    x2 = x.reshape(n, d * m1)

    has_bias = bias is not None
    in_specs = [
        pl.BlockSpec((tn, td * m1), lambda j, i: (i, j)),
        pl.BlockSpec((td, m1, m2), lambda j, i: (j, 0, 0)),
    ]
    operands = [x2, weight]
    if has_bias:
        in_specs.append(pl.BlockSpec((td, m2), lambda j, i: (j, 0)))
        operands.append(bias)

    out2 = pl.pallas_call(
        _make_kernel(td, m1, m2, has_bias),
        out_shape=jax.ShapeDtypeStruct((n, d * m2), out_dtype),
        grid_spec=pltpu.PrefetchScalarGridSpec(
            num_scalar_prefetch=0,
            # d outer, n inner: the weight block index is constant across the
            # inner n loop, so its DMA is not re-issued for every n tile.
            grid=(grid_d, grid_n),
            in_specs=in_specs,
            out_specs=pl.BlockSpec((tn, td * m2), lambda j, i: (i, j)),
        ),
        compiler_params=pltpu.CompilerParams(
            dimension_semantics=("parallel", "parallel"),
            vmem_limit_bytes=_VMEM_LIMIT_BYTES,
        ),
    )(*operands)

    return out2.reshape(n, d, m2)


if __name__ == "__main__":
    # Small shapes consistent with the module's forward: n=2, d=4, m1=16, m2=32
    n, d, m1, m2 = 2, 4, 16, 32

    key = jax.random.PRNGKey(0)
    kx, kw, kb = jax.random.split(key, 3)

    # Deterministic parameter init mirroring reset_parameters():
    # uniform(-sqrt(1/m1), sqrt(1/m1))
    bound = math.sqrt(1.0 / m1)
    weight = jax.random.uniform(kw, (d, m1, m2), jnp.float32, -bound, bound)
    bias = jax.random.uniform(kb, (d, m2), jnp.float32, -bound, bound)
    x = jax.random.normal(kx, (n, d, m1), jnp.float32)

    # With bias
    out = jax.block_until_ready(locally_connected_forward(x, weight, bias))
    ref = jnp.einsum("ndi,dio->ndo", x, weight) + bias[None, :, :]
    assert out.shape == (n, d, m2)
    assert jnp.allclose(out, ref, atol=1e-5, rtol=1e-5)

    # Specialised no-bias variant
    out_nb = jax.block_until_ready(locally_connected_forward(x, weight, None))
    ref_nb = jnp.einsum("ndi,dio->ndo", x, weight)
    assert jnp.allclose(out_nb, ref_nb, atol=1e-5, rtol=1e-5)

    print("KERNEL_OK")
</pallas_src>

<mosaic_0001>
module attributes {stable_mosaic.version = 11 : i64} {
  func.func @kernel(%arg0: i32, %arg1: i32, %arg2: memref<2x64xf32, #tpu.memory_space<vmem>>, %arg3: memref<4x16x32xf32, #tpu.memory_space<vmem>>, %arg4: memref<4x32xf32, #tpu.memory_space<vmem>>, %arg5: memref<2x128xf32, #tpu.memory_space<vmem>>) attributes {dimension_semantics = [#tpu.dimension_semantics<parallel>, #tpu.dimension_semantics<parallel>], iteration_bounds = array<i64: 1, 1>, scalar_prefetch = 0 : i64, scratch_operands = 0 : i64, tpu.core_type = #tpu.core_type<tc>, window_params = [{transform_indices = @transform_0, window_bounds = array<i64: 2, 64>}, {transform_indices = @transform_1, window_bounds = array<i64: 4, 16, 32>}, {transform_indices = @transform_2, window_bounds = array<i64: 4, 32>}, {transform_indices = @transform_3, window_bounds = array<i64: 2, 128>}]} {
    %c0 = arith.constant 0 : index
    %c0_0 = arith.constant 0 : index
    %0 = vector.load %arg2[%c0, %c0_0] : memref<2x64xf32, #tpu.memory_space<vmem>>, vector<2x64xf32>
    %1 = vector.extract_strided_slice %0 {offsets = [0, 0], sizes = [2, 16], strides = [1, 1]} : vector<2x64xf32> to vector<2x16xf32>
    %c0_1 = arith.constant 0 : index
    %c0_2 = arith.constant 0 : index
    %c0_3 = arith.constant 0 : index
    %2 = vector.load %arg3[%c0_1, %c0_2, %c0_3] : memref<4x16x32xf32, #tpu.memory_space<vmem>>, vector<1x16x32xf32>
    %3 = vector.shape_cast %2 : vector<1x16x32xf32> to vector<16x32xf32>
    %cst = arith.constant dense<0.000000e+00> : vector<2x32xf32>
    %4 = tpu.matmul %1, %3, %cst {dimension_numbers = #tpu.dot_dimension_numbers<[1], [0], [0], [1], [0, 0, 1, 1], [], []>} : vector<2x16xf32>, vector<16x32xf32>, vector<2x32xf32> -> vector<2x32xf32>
    %c0_4 = arith.constant 0 : index
    %c0_5 = arith.constant 0 : index
    %5 = vector.load %arg4[%c0_4, %c0_5] : memref<4x32xf32, #tpu.memory_space<vmem>>, vector<1x32xf32>
    %6 = vector.broadcast %5 : vector<1x32xf32> to vector<2x32xf32>
    %7 = arith.addf %4, %6 : vector<2x32xf32>
    %8 = vector.extract_strided_slice %0 {offsets = [0, 16], sizes = [2, 16], strides = [1, 1]} : vector<2x64xf32> to vector<2x16xf32>
    %c1 = arith.constant 1 : index
    %c0_6 = arith.constant 0 : index
    %c0_7 = arith.constant 0 : index
    %9 = vector.load %arg3[%c1, %c0_6, %c0_7] : memref<4x16x32xf32, #tpu.memory_space<vmem>>, vector<1x16x32xf32>
    %10 = vector.shape_cast %9 : vector<1x16x32xf32> to vector<16x32xf32>
    %cst_8 = arith.constant dense<0.000000e+00> : vector<2x32xf32>
    %11 = tpu.matmul %8, %10, %cst_8 {dimension_numbers = #tpu.dot_dimension_numbers<[1], [0], [0], [1], [0, 0, 1, 1], [], []>} : vector<2x16xf32>, vector<16x32xf32>, vector<2x32xf32> -> vector<2x32xf32>
    %c1_9 = arith.constant 1 : index
    %c0_10 = arith.constant 0 : index
    %12 = vector.load %arg4[%c1_9, %c0_10] : memref<4x32xf32, #tpu.memory_space<vmem>>, vector<1x32xf32>
    %13 = vector.broadcast %12 : vector<1x32xf32> to vector<2x32xf32>
    %14 = arith.addf %11, %13 : vector<2x32xf32>
    %15 = vector.extract_strided_slice %0 {offsets = [0, 32], sizes = [2, 16], strides = [1, 1]} : vector<2x64xf32> to vector<2x16xf32>
    %c2 = arith.constant 2 : index
    %c0_11 = arith.constant 0 : index
    %c0_12 = arith.constant 0 : index
    %16 = vector.load %arg3[%c2, %c0_11, %c0_12] : memref<4x16x32xf32, #tpu.memory_space<vmem>>, vector<1x16x32xf32>
    %17 = vector.shape_cast %16 : vector<1x16x32xf32> to vector<16x32xf32>
    %cst_13 = arith.constant dense<0.000000e+00> : vector<2x32xf32>
    %18 = tpu.matmul %15, %17, %cst_13 {dimension_numbers = #tpu.dot_dimension_numbers<[1], [0], [0], [1], [0, 0, 1, 1], [], []>} : vector<2x16xf32>, vector<16x32xf32>, vector<2x32xf32> -> vector<2x32xf32>
    %c2_14 = arith.constant 2 : index
    %c0_15 = arith.constant 0 : index
    %19 = vector.load %arg4[%c2_14, %c0_15] : memref<4x32xf32, #tpu.memory_space<vmem>>, vector<1x32xf32>
    %20 = vector.broadcast %19 : vector<1x32xf32> to vector<2x32xf32>
    %21 = arith.addf %18, %20 : vector<2x32xf32>
    %22 = vector.extract_strided_slice %0 {offsets = [0, 48], sizes = [2, 16], strides = [1, 1]} : vector<2x64xf32> to vector<2x16xf32>
    %c3 = arith.constant 3 : index
    %c0_16 = arith.constant 0 : index
    %c0_17 = arith.constant 0 : index
    %23 = vector.load %arg3[%c3, %c0_16, %c0_17] : memref<4x16x32xf32, #tpu.memory_space<vmem>>, vector<1x16x32xf32>
    %24 = vector.shape_cast %23 : vector<1x16x32xf32> to vector<16x32xf32>
    %cst_18 = arith.constant dense<0.000000e+00> : vector<2x32xf32>
    %25 = tpu.matmul %22, %24, %cst_18 {dimension_numbers = #tpu.dot_dimension_numbers<[1], [0], [0], [1], [0, 0, 1, 1], [], []>} : vector<2x16xf32>, vector<16x32xf32>, vector<2x32xf32> -> vector<2x32xf32>
    %c3_19 = arith.constant 3 : index
    %c0_20 = arith.constant 0 : index
    %26 = vector.load %arg4[%c3_19, %c0_20] : memref<4x32xf32, #tpu.memory_space<vmem>>, vector<1x32xf32>
    %27 = vector.broadcast %26 : vector<1x32xf32> to vector<2x32xf32>
    %28 = arith.addf %25, %27 : vector<2x32xf32>
    %29 = tpu.concatenate %7, %14, %21, %28 in 1 : vector<2x32xf32>, vector<2x32xf32>, vector<2x32xf32>, vector<2x32xf32> -> vector<2x128xf32>
    %c0_21 = arith.constant 0 : index
    %c0_22 = arith.constant 0 : index
    %30 = vector.load %arg5[%c0_21, %c0_22] : memref<2x128xf32, #tpu.memory_space<vmem>>, vector<2x128xf32>
    tpu.vector_store %arg5[%c0_21, %c0_22], %29 {strides = array<i32>} : memref<2x128xf32, #tpu.memory_space<vmem>>, vector<2x128xf32>,
    return
  }
  func.func @transform_0(%arg0: i32, %arg1: i32) -> (i32, i32) {
    %c0_i32 = arith.constant 0 : i32
    return %arg1, %arg0 : i32, i32
  }
  func.func @transform_1(%arg0: i32, %arg1: i32) -> (i32, i32, i32) {
    %c0_i32 = arith.constant 0 : i32
    %c0_i32_0 = arith.constant 0 : i32
    %c0_i32_1 = arith.constant 0 : i32
    return %arg0, %c0_i32, %c0_i32_0 : i32, i32, i32
  }
  func.func @transform_2(%arg0: i32, %arg1: i32) -> (i32, i32) {
    %c0_i32 = arith.constant 0 : i32
    %c0_i32_0 = arith.constant 0 : i32
    return %arg0, %c0_i32 : i32, i32
  }
  func.func @transform_3(%arg0: i32, %arg1: i32) -> (i32, i32) {
    %c0_i32 = arith.constant 0 : i32
    return %arg1, %arg0 : i32, i32
  }
}

</mosaic_0001>

<llo_original>
// kernel: tpu_custom_call.1
$region0: #{tpu_custom_call.1}
  #allocation0 [shape = 'u32[]', space=smem, size = 0x4, offset = 0x4, fixed_abs, tag = 'smem constant byte address 0x4 - core index']
  #allocation1 [shape = 'u32[144,128]{1,0:T(1,128)}', space=vmem, size = 0x12000, scoped, tag = 'internal scratch']
  %s0 = inlined_call_operand.hbm [shape: f32[2,64], index: 0, kind: input, shape index: {}]
  %s1 = inlined_call_operand.hbm [shape: f32[4,16,32], index: 1, kind: input, shape index: {}]
  %s2 = inlined_call_operand.vmem [shape: f32[4,32], index: 2, kind: input, shape index: {}]
  %s3 = inlined_call_operand.hbm [shape: f32[2,128], index: 3, kind: output, shape index: {}]
  %s4 = sld [smem:[#allocation0]]
  $region30: #{tpu_custom_call.1} parent=0
    _
  %s6 = ssub.s32 1, %s4
  %s7 = scalar_select 0, %s6, %s4
  $region1: #{tpu_custom_call.1} parent=0
    #allocation2 [shape = 'u8[1024]{0}', space=vmem, size = 0x400, scoped, tag = 'input window, operand 0, single buffered']
    #allocation3 [shape = 's32[1]{0}', space=sflag, size = 0x4, scoped, tag = 'scoped memory for tpu_custom_call.1']
    #allocation4 [shape = 's32[1]{0}', space=sflag, size = 0x4, scoped, tag = 'scoped memory for tpu_custom_call.1']
    #allocation5 [shape = 'u8[32768]{0}', space=vmem, size = 0x8000, scoped, tag = 'input window, operand 1, single buffered']
    #allocation6 [shape = 's32[1]{0}', space=sflag, size = 0x4, scoped, tag = 'scoped memory for tpu_custom_call.1']
    #allocation7 [shape = 'u8[1024]{0}', space=vmem, size = 0x400, scoped, tag = 'output window, operand 0, single buffered']
    %8 = vsyncpa [#allocation3], 0
    %9 = vsyncpa [#allocation6], 0
    %10 = vsyncpa [#allocation4], 0
    // Predicated region
    $region2: #{tpu_custom_call.1} parent=1 // pred_check
      _
    $region3: #{tpu_custom_call.1} parent=1 // pred_check_branch
      %12 = sbr.rel (0) target = $region5
    $region4: #{tpu_custom_call.1} parent=1 // pred_region
      %s14 = ssub.s32 32, 32
      %15 = vsyncadd [#allocation3], %s14
      %s17 = sshll.u32 [#allocation2], 4
      %s18 = int_to_ptr.vmem [resolvable:$true] %s17
      %20 = dma.hbm_to_vmem [thread:$0]  %s0, 32, %s18, [#allocation3]
    $region5: #{tpu_custom_call.1} parent=1 // pred_fallthru
      _
    // Predicated region
    $region6: #{tpu_custom_call.1} parent=1 // pred_check
      _
    $region7: #{tpu_custom_call.1} parent=1 // pred_check_branch
      %22 = sbr.rel (0) target = $region9
    $region8: #{tpu_custom_call.1} parent=1 // pred_region
      %s24 = ssub.s32 1024, 1024
      %25 = vsyncadd [#allocation6], %s24
      %s26 = sshll.u32 [#allocation5], 4
      %s27 = int_to_ptr.vmem [resolvable:$true] %s26
      %32 = dma.hbm_to_vmem [thread:$0]  %s1, 1024, %s27, [#allocation6], 128, 128, 8
    $region9: #{tpu_custom_call.1} parent=1 // pred_fallthru
      _
    // Predicated region
    $region10: #{tpu_custom_call.1} parent=1 // pred_check
      _
    $region11: #{tpu_custom_call.1} parent=1 // pred_check_branch
      %34 = sbr.rel (0) target = $region13
    $region12: #{tpu_custom_call.1} parent=1 // pred_region
      _
    $region13: #{tpu_custom_call.1} parent=1 // pred_fallthru
      _
    // Predicated region
    $region14: #{tpu_custom_call.1} parent=1 // pred_check
      _
    $region15: #{tpu_custom_call.1} parent=1 // pred_check_branch
      %36 = sbr.rel (0) target = $region17
    $region16: #{tpu_custom_call.1} parent=1 // pred_region
      %37 = dma.done [#allocation3], 32
    $region17: #{tpu_custom_call.1} parent=1 // pred_fallthru
      _
    // Predicated region
    $region18: #{tpu_custom_call.1} parent=1 // pred_check
      _
    $region19: #{tpu_custom_call.1} parent=1 // pred_check_branch
      %39 = sbr.rel (0) target = $region21
    $region20: #{tpu_custom_call.1} parent=1 // pred_region
      %40 = dma.done [#allocation6], 1024
    $region21: #{tpu_custom_call.1} parent=1 // pred_fallthru
      _
    %v41 = vld [vmem:[#allocation2] sm:$0x3]
    %v42 = vld [vmem:[#allocation5] sm:$0xff]
    %v43 = vld [vmem:[#allocation5 + $0x8] sm:$0xff]
    %v44 = vld [vmem:[%s2] sm:$0x1]
    %v45 = vlaneseq
    %v46 = vshrl.u32 %v45, 7
    %v47 = vsub.s32 0, %v46
    %v48 = vrot.slane %v44, %v47
    %vm49 = vcmask 130048
    %v51 = vsel %vm49, %v41, 0
    %53 = vmatprep.subr.mxu0 0.0
    %54 = vmatpush1.msra.mxu0 %v42
    %55 = vmatprep.subr.mxu0 0.0
    %56 = vmatpush1.msra.mxu0 %v43
    %57 = vmatprep.subr.mxu0 0.0
    %58 = vmatpush1.msra.mxu0 0.0
    %59 = vmatprep.subr.mxu0 0.0
    %60 = vmatpush1.msra.mxu0 0.0
    %61 = vmatprep.subr.mxu0 0.0
    %62 = vmatpush1.msra.mxu0 0.0
    %63 = vmatprep.subr.mxu0 0.0
    %64 = vmatpush1.msra.mxu0 0.0
    %65 = vmatprep.subr.mxu0 0.0
    %66 = vmatpush1.msra.mxu0 0.0
    %67 = vmatprep.subr.mxu0 0.0
    %68 = vmatpush1.msra.mxu0 0.0
    %69 = vmatprep.subr.mxu0 0.0
    %70 = vmatpush1.msra.mxu0 0.0
    %71 = vmatprep.subr.mxu0 0.0
    %72 = vmatpush1.msra.mxu0 0.0
    %73 = vmatprep.subr.mxu0 0.0
    %74 = vmatpush1.msra.mxu0 0.0
    %75 = vmatprep.subr.mxu0 0.0
    %76 = vmatpush1.msra.mxu0 0.0
    %77 = vmatprep.subr.mxu0 0.0
    %78 = vmatpush1.msra.mxu0 0.0
    %79 = vmatprep.subr.mxu0 0.0
    %80 = vmatpush1.msra.mxu0 0.0
    %81 = vmatprep.subr.mxu0 0.0
    %82 = vmatpush1.msra.mxu0 0.0
    %83 = vmatprep.subr.mxu0 0.0
    %84 = vmatpush1.msra.mxu0 0.0
    %85 = vmatprep.subr.mxu0 0.0
    %86 = vmatpush1.msra.mxu0 0.0
    %87 = vmatprep.subr.mxu0 0.0
    %88 = vmatpush1.msra.mxu0 0.0
    %89 = vmatprep.subr.mxu0 0.0
    %90 = vmatpush1.msra.mxu0 0.0
    %91 = vmatprep.subr.mxu0 0.0
    %92 = vmatpush1.msra.mxu0 0.0
    %93 = vmatprep.subr.mxu0 0.0
    %94 = vmatpush1.msra.mxu0 0.0
    %95 = vmatprep.subr.mxu0 0.0
    %96 = vmatpush1.msra.mxu0 0.0
    %97 = vmatprep.subr.mxu0 0.0
    %98 = vmatpush1.msra.mxu0 0.0
    %99 = vmatprep.subr.mxu0 0.0
    %100 = vmatpush1.msra.mxu0 0.0
    %101 = vmatprep.subr.mxu0 0.0
    %102 = vmatpush1.msra.mxu0 0.0
    %103 = vmatprep.subr.mxu0 0.0
    %104 = vmatpush1.msra.mxu0 0.0
    %105 = vmatprep.subr.mxu0 0.0
    %106 = vmatpush1.msra.mxu0 0.0
    %107 = vmatprep.subr.mxu0 0.0
    %108 = vmatpush1.msra.mxu0 0.0
    %109 = vmatprep.subr.mxu0 0.0
    %110 = vmatpush1.msra.mxu0 0.0
    %111 = vmatprep.subr.mxu0 0.0
    %112 = vmatpush1.msra.mxu0 0.0
    %113 = vmatprep.subr.mxu0 0.0
    %114 = vmatpush1.msra.mxu0 0.0
    %115 = vmatprep.subr.mxu0 0.0
    %116 = vmatpush1.msra.mxu0 0.0
    %117 = vmatprep.mubr.f32.mxu0 0.0
    %118 = vmatmul.mubr.f32.gmra.mrb[0].mxu0 %v51
    %v119 = vpop.f32.mrb[0].mxu0
    %v120 = vadd.f32 %v48, %v119
    %v121 = vpop.f32.mrb[0].mxu0
    %122 = vdwg.mxu0
    %s123 = scalar_lea.vmem [#allocation5], 16
    %v124 = vld [vmem:[%s123] sm:$0xff]
    %v125 = vld [vmem:[%s123 + $0x8] sm:$0xff]
    %v126 = vld [vmem:[%s2 + $0x1] sm:$0x1]
    %v127 = vlaneseq
    %v128 = vshrl.u32 %v127, 7
    %v129 = vsub.s32 0, %v128
    %v130 = vrot.slane %v126, %v129
    %131 = vrot.lane.b32.xlu0 %v41, 112
    %v132 = vpop.permute.xlu0 %131
    %v133 = vsel %vm49, %v132, 0
    %135 = vmatprep.subr.mxu0 0.0
    %136 = vmatpush1.msra.mxu0 %v124
    %137 = vmatprep.subr.mxu0 0.0
    %138 = vmatpush1.msra.mxu0 %v125
    %139 = vmatprep.subr.mxu0 0.0
    %140 = vmatpush1.msra.mxu0 0.0
    %141 = vmatprep.subr.mxu0 0.0
    %142 = vmatpush1.msra.mxu0 0.0
    %143 = vmatprep.subr.mxu0 0.0
    %144 = vmatpush1.msra.mxu0 0.0
    %145 = vmatprep.subr.mxu0 0.0
    %146 = vmatpush1.msra.mxu0 0.0
    %147 = vmatprep.subr.mxu0 0.0
    %148 = vmatpush1.msra.mxu0 0.0
    %149 = vmatprep.subr.mxu0 0.0
    %150 = vmatpush1.msra.mxu0 0.0
    %151 = vmatprep.subr.mxu0 0.0
    %152 = vmatpush1.msra.mxu0 0.0
    %153 = vmatprep.subr.mxu0 0.0
    %154 = vmatpush1.msra.mxu0 0.0
    %155 = vmatprep.subr.mxu0 0.0
    %156 = vmatpush1.msra.mxu0 0.0
    %157 = vmatprep.subr.mxu0 0.0
    %158 = vmatpush1.msra.mxu0 0.0
    %159 = vmatprep.subr.mxu0 0.0
    %160 = vmatpush1.msra.mxu0 0.0
    %161 = vmatprep.subr.mxu0 0.0
    %162 = vmatpush1.msra.mxu0 0.0
    %163 = vmatprep.subr.mxu0 0.0
    %164 = vmatpush1.msra.mxu0 0.0
    %165 = vmatprep.subr.mxu0 0.0
    %166 = vmatpush1.msra.mxu0 0.0
    %167 = vmatprep.subr.mxu0 0.0
    %168 = vmatpush1.msra.mxu0 0.0
    %169 = vmatprep.subr.mxu0 0.0
    %170 = vmatpush1.msra.mxu0 0.0
    %171 = vmatprep.subr.mxu0 0.0
    %172 = vmatpush1.msra.mxu0 0.0
    %173 = vmatprep.subr.mxu0 0.0
    %174 = vmatpush1.msra.mxu0 0.0
    %175 = vmatprep.subr.mxu0 0.0
    %176 = vmatpush1.msra.mxu0 0.0
    %177 = vmatprep.subr.mxu0 0.0
    %178 = vmatpush1.msra.mxu0 0.0
    %179 = vmatprep.subr.mxu0 0.0
    %180 = vmatpush1.msra.mxu0 0.0
    %181 = vmatprep.subr.mxu0 0.0
    %182 = vmatpush1.msra.mxu0 0.0
    %183 = vmatprep.subr.mxu0 0.0
    %184 = vmatpush1.msra.mxu0 0.0
    %185 = vmatprep.subr.mxu0 0.0
    %186 = vmatpush1.msra.mxu0 0.0
    %187 = vmatprep.subr.mxu0 0.0
    %188 = vmatpush1.msra.mxu0 0.0
    %189 = vmatprep.subr.mxu0 0.0
    %190 = vmatpush1.msra.mxu0 0.0
    %191 = vmatprep.subr.mxu0 0.0
    %192 = vmatpush1.msra.mxu0 0.0
    %193 = vmatprep.subr.mxu0 0.0
    %194 = vmatpush1.msra.mxu0 0.0
    %195 = vmatprep.subr.mxu0 0.0
    %196 = vmatpush1.msra.mxu0 0.0
    %197 = vmatprep.subr.mxu0 0.0
    %198 = vmatpush1.msra.mxu0 0.0
    %199 = vmatprep.mubr.f32.mxu0 0.0
    %200 = vmatmul.mubr.f32.gmra.mrb[0].mxu0 %v133
    %v201 = vpop.f32.mrb[0].mxu0
    %v202 = vadd.f32 %v130, %v201
    %v203 = vpop.f32.mrb[0].mxu0
    %204 = vdwg.mxu0
    %s205 = scalar_lea.vmem [#allocation5], 32
    %v206 = vld [vmem:[%s205] sm:$0xff]
    %v207 = vld [vmem:[%s205 + $0x8] sm:$0xff]
    %v208 = vld [vmem:[%s2 + $0x2] sm:$0x1]
    %v209 = vlaneseq
    %v210 = vshrl.u32 %v209, 7
    %v211 = vsub.s32 0, %v210
    %v212 = vrot.slane %v208, %v211
    %213 = vrot.lane.b32.xlu0 %v41, 96
    %v214 = vpop.permute.xlu0 %213
    %v215 = vsel %vm49, %v214, 0
    %217 = vmatprep.subr.mxu0 0.0
    %218 = vmatpush1.msra.mxu0 %v206
    %219 = vmatprep.subr.mxu0 0.0
    %220 = vmatpush1.msra.mxu0 %v207
    %221 = vmatprep.subr.mxu0 0.0
    %222 = vmatpush1.msra.mxu0 0.0
    %223 = vmatprep.subr.mxu0 0.0
    %224 = vmatpush1.msra.mxu0 0.0
    %225 = vmatprep.subr.mxu0 0.0
    %226 = vmatpush1.msra.mxu0 0.0
    %227 = vmatprep.subr.mxu0 0.0
    %228 = vmatpush1.msra.mxu0 0.0
    %229 = vmatprep.subr.mxu0 0.0
    %230 = vmatpush1.msra.mxu0 0.0
    %231 = vmatprep.subr.mxu0 0.0
    %232 = vmatpush1.msra.mxu0 0.0
    %233 = vmatprep.subr.mxu0 0.0
    %234 = vmatpush1.msra.mxu0 0.0
    %235 = vmatprep.subr.mxu0 0.0
    %236 = vmatpush1.msra.mxu0 0.0
    %237 = vmatprep.subr.mxu0 0.0
    %238 = vmatpush1.msra.mxu0 0.0
    %239 = vmatprep.subr.mxu0 0.0
    %240 = vmatpush1.msra.mxu0 0.0
    %241 = vmatprep.subr.mxu0 0.0
    %242 = vmatpush1.msra.mxu0 0.0
    %243 = vmatprep.subr.mxu0 0.0
    %244 = vmatpush1.msra.mxu0 0.0
    %245 = vmatprep.subr.mxu0 0.0
    %246 = vmatpush1.msra.mxu0 0.0
    %247 = vmatprep.subr.mxu0 0.0
    %248 = vmatpush1.msra.mxu0 0.0
    %249 = vmatprep.subr.mxu0 0.0
    %250 = vmatpush1.msra.mxu0 0.0
    %251 = vmatprep.subr.mxu0 0.0
    %252 = vmatpush1.msra.mxu0 0.0
    %253 = vmatprep.subr.mxu0 0.0
    %254 = vmatpush1.msra.mxu0 0.0
    %255 = vmatprep.subr.mxu0 0.0
    %256 = vmatpush1.msra.mxu0 0.0
    %257 = vmatprep.subr.mxu0 0.0
    %258 = vmatpush1.msra.mxu0 0.0
    %259 = vmatprep.subr.mxu0 0.0
    %260 = vmatpush1.msra.mxu0 0.0
    %261 = vmatprep.subr.mxu0 0.0
    %262 = vmatpush1.msra.mxu0 0.0
    %263 = vmatprep.subr.mxu0 0.0
    %264 = vmatpush1.msra.mxu0 0.0
    %265 = vmatprep.subr.mxu0 0.0
    %266 = vmatpush1.msra.mxu0 0.0
    %267 = vmatprep.subr.mxu0 0.0
    %268 = vmatpush1.msra.mxu0 0.0
    %269 = vmatprep.subr.mxu0 0.0
    %270 = vmatpush1.msra.mxu0 0.0
    %271 = vmatprep.subr.mxu0 0.0
    %272 = vmatpush1.msra.mxu0 0.0
    %273 = vmatprep.subr.mxu0 0.0
    %274 = vmatpush1.msra.mxu0 0.0
    %275 = vmatprep.subr.mxu0 0.0
    %276 = vmatpush1.msra.mxu0 0.0
    %277 = vmatprep.subr.mxu0 0.0
    %278 = vmatpush1.msra.mxu0 0.0
    %279 = vmatprep.subr.mxu0 0.0
    %280 = vmatpush1.msra.mxu0 0.0
    %281 = vmatprep.mubr.f32.mxu0 0.0
    %282 = vmatmul.mubr.f32.gmra.mrb[0].mxu0 %v215
    %v283 = vpop.f32.mrb[0].mxu0
    %v284 = vadd.f32 %v212, %v283
    %v285 = vpop.f32.mrb[0].mxu0
    %286 = vdwg.mxu0
    %s287 = scalar_lea.vmem [#allocation5], 48
    %v288 = vld [vmem:[%s287] sm:$0xff]
    %v289 = vld [vmem:[%s287 + $0x8] sm:$0xff]
    %v290 = vld [vmem:[%s2 + $0x3] sm:$0x1]
    %v291 = vlaneseq
    %v292 = vshrl.u32 %v291, 7
    %v293 = vsub.s32 0, %v292
    %v294 = vrot.slane %v290, %v293
    %295 = vrot.lane.b32.xlu0 %v41, 80
    %v296 = vpop.permute.xlu0 %295
    %v297 = vsel %vm49, %v296, 0
    %299 = vmatprep.subr.mxu0 0.0
    %300 = vmatpush1.msra.mxu0 %v288
    %301 = vmatprep.subr.mxu0 0.0
    %302 = vmatpush1.msra.mxu0 %v289
    %303 = vmatprep.subr.mxu0 0.0
    %304 = vmatpush1.msra.mxu0 0.0
    %305 = vmatprep.subr.mxu0 0.0
    %306 = vmatpush1.msra.mxu0 0.0
    %307 = vmatprep.subr.mxu0 0.0
    %308 = vmatpush1.msra.mxu0 0.0
    %309 = vmatprep.subr.mxu0 0.0
    %310 = vmatpush1.msra.mxu0 0.0
    %311 = vmatprep.subr.mxu0 0.0
    %312 = vmatpush1.msra.mxu0 0.0
    %313 = vmatprep.subr.mxu0 0.0
    %314 = vmatpush1.msra.mxu0 0.0
    %315 = vmatprep.subr.mxu0 0.0
    %316 = vmatpush1.msra.mxu0 0.0
    %317 = vmatprep.subr.mxu0 0.0
    %318 = vmatpush1.msra.mxu0 0.0
    %319 = vmatprep.subr.mxu0 0.0
    %320 = vmatpush1.msra.mxu0 0.0
    %321 = vmatprep.subr.mxu0 0.0
    %322 = vmatpush1.msra.mxu0 0.0
    %323 = vmatprep.subr.mxu0 0.0
    %324 = vmatpush1.msra.mxu0 0.0
    %325 = vmatprep.subr.mxu0 0.0
    %326 = vmatpush1.msra.mxu0 0.0
    %327 = vmatprep.subr.mxu0 0.0
    %328 = vmatpush1.msra.mxu0 0.0
    %329 = vmatprep.subr.mxu0 0.0
    %330 = vmatpush1.msra.mxu0 0.0
    %331 = vmatprep.subr.mxu0 0.0
    %332 = vmatpush1.msra.mxu0 0.0
    %333 = vmatprep.subr.mxu0 0.0
    %334 = vmatpush1.msra.mxu0 0.0
    %335 = vmatprep.subr.mxu0 0.0
    %336 = vmatpush1.msra.mxu0 0.0
    %337 = vmatprep.subr.mxu0 0.0
    %338 = vmatpush1.msra.mxu0 0.0
    %339 = vmatprep.subr.mxu0 0.0
    %340 = vmatpush1.msra.mxu0 0.0
    %341 = vmatprep.subr.mxu0 0.0
    %342 = vmatpush1.msra.mxu0 0.0
    %343 = vmatprep.subr.mxu0 0.0
    %344 = vmatpush1.msra.mxu0 0.0
    %345 = vmatprep.subr.mxu0 0.0
    %346 = vmatpush1.msra.mxu0 0.0
    %347 = vmatprep.subr.mxu0 0.0
    %348 = vmatpush1.msra.mxu0 0.0
    %349 = vmatprep.subr.mxu0 0.0
    %350 = vmatpush1.msra.mxu0 0.0
    %351 = vmatprep.subr.mxu0 0.0
    %352 = vmatpush1.msra.mxu0 0.0
    %353 = vmatprep.subr.mxu0 0.0
    %354 = vmatpush1.msra.mxu0 0.0
    %355 = vmatprep.subr.mxu0 0.0
    %356 = vmatpush1.msra.mxu0 0.0
    %357 = vmatprep.subr.mxu0 0.0
    %358 = vmatpush1.msra.mxu0 0.0
    %359 = vmatprep.subr.mxu0 0.0
    %360 = vmatpush1.msra.mxu0 0.0
    %361 = vmatprep.subr.mxu0 0.0
    %362 = vmatpush1.msra.mxu0 0.0
    %363 = vmatprep.mubr.f32.mxu0 0.0
    %364 = vmatmul.mubr.f32.gmra.mrb[0].mxu0 %v297
    %v365 = vpop.f32.mrb[0].mxu0
    %v366 = vadd.f32 %v294, %v365
    %v367 = vpop.f32.mrb[0].mxu0
    %368 = vdwg.mxu0
    %370 = vrot.lane.b32.xlu0 %v202, 32
    %v371 = vpop.permute.xlu0 %370
    %374 = vrot.lane.b32.xlu0 %v284, 64
    %v375 = vpop.permute.xlu0 %374
    %378 = vrot.lane.b32.xlu0 %v366, 96
    %v379 = vpop.permute.xlu0 %378
    %vm381 = vcmask 261120
    %v382 = vsel %vm381, %v120, %v371
    %vm383 = vcmask 523264
    %v384 = vsel %vm383, %v382, %v375
    %vm385 = vcmask 785408
    %v386 = vsel %vm385, %v384, %v379
    %387 = vst [vmem:[#allocation7] sm:$0x3] %v386
    // Predicated region
    $region22: #{tpu_custom_call.1} parent=1 // pred_check
      _
    $region23: #{tpu_custom_call.1} parent=1 // pred_check_branch
      %389 = sbr.rel (0) target = $region25
    $region24: #{tpu_custom_call.1} parent=1 // pred_region
      %s391 = ssub.s32 32, 32
      %392 = vsyncadd [#allocation4], %s391
      %s394 = sshll.u32 [#allocation7], 4
      %s395 = int_to_ptr.vmem [resolvable:$true] %s394
      %397 = dma.vmem_to_hbm [thread:$0]  %s395, 32, %s3, [#allocation4]
    $region25: #{tpu_custom_call.1} parent=1 // pred_fallthru
      _
    // Predicated region
    $region26: #{tpu_custom_call.1} parent=1 // pred_check
      _
    $region27: #{tpu_custom_call.1} parent=1 // pred_check_branch
      %399 = sbr.rel (0) target = $region29
    $region28: #{tpu_custom_call.1} parent=1 // pred_region
      %400 = dma.done [#allocation4], 32
    $region29: #{tpu_custom_call.1} parent=1 // pred_fallthru
      _
    %401 = vsyncpa [#allocation3], 1
    %402 = vsyncpa [#allocation6], 1
    %403 = vsyncpa [#allocation4], 1

</llo_original>
